<compile_context>
chip_gen: v6e
topology: v6e:2x2x1
jax: 0.10.0
libtpu: 0.0.40
codegen_flags: <defaults>
</compile_context>

<pallas_src>
import functools

import jax
import jax.numpy as jnp
from jax.experimental import pallas as pl
from jax.experimental.pallas import tpu as pltpu


MAX_TILE_B = 32768        # cap on lanes per grid step (v7x-safe; sweepable 8K..32K)
SINGLE_TILE_MAX = 8192    # below this, one tile (splitting only adds per-step overhead)
VMEM_LIMIT_BYTES = 32 * 1024 * 1024   # >= v5e's 16 MiB scoped default; <= v6e/v7x defaults


def _cdiv(a, b):
    return -(-a // b)


def _choose_tile_b(n_rows):
    """One tile for small batches; otherwise tiles <= MAX_TILE_B with an even
    tile count so the 'parallel' grid axis can shard across v7x's 2 TensorCores."""
    b128 = max(128, _cdiv(n_rows, 128) * 128)
    if b128 <= SINGLE_TILE_MAX:
        return b128
    n_tiles = max(2, _cdiv(b128, MAX_TILE_B))
    if n_tiles % 2:
        n_tiles += 1
    return _cdiv(_cdiv(b128, n_tiles), 128) * 128


def _dqn_kernel(n_hidden_transitions, *refs):
    """Fused MLP forward, batch on lanes.

    refs layout:
      refs[0]               : x_ref   (3, TILE_B)        bf16
      refs[1], refs[2]      : w_in    (H0, 3) bf16,  b_in (H0, 1) f32
      n_hidden_transitions pairs (w_h (Hi+1, Hi) bf16, b_h (Hi+1, 1) f32)
      refs[-3], refs[-2]    : w_out   (2, Hlast) bf16, b_out (2, 1) f32
      refs[-1]              : o_ref   (2, TILE_B)        bf16
    """
    x_ref = refs[0]
    o_ref = refs[-1]
    p = refs[1:-1]

    # ---- input layer: K=3 contraction on the VPU (broadcast FMAs), f32 math ----
    w0 = p[0][...].astype(jnp.float32)                      # (H0, 3)
    b0 = p[1][...]                                          # (H0, 1) f32
    h = (w0[:, 0:1] * x_ref[0:1, :].astype(jnp.float32)
         + w0[:, 1:2] * x_ref[1:2, :].astype(jnp.float32)
         + w0[:, 2:3] * x_ref[2:3, :].astype(jnp.float32)
         + b0)
    # cast folded into the ReLU chain: only the bf16 copy of h stays live
    h = jnp.maximum(h, 0.0).astype(jnp.bfloat16)            # (H0, TILE_B) bf16

    # ---- hidden transitions: dropout (identity, eval) -> Linear -> ReLU (MXU) ----
    for i in range(n_hidden_transitions):
        w_h = p[2 + 2 * i]                                  # (Hi+1, Hi) bf16
        b_h = p[3 + 2 * i]                                  # (Hi+1, 1)  f32
        h = jnp.dot(w_h[...], h, preferred_element_type=jnp.float32) + b_h[...]
        h = jnp.maximum(h, 0.0).astype(jnp.bfloat16)

    # ---- output layer (no activation), lane-dense bf16 store ----
    w_out, b_out = p[-2], p[-1]                             # (2, Hlast) bf16, (2, 1) f32
    out = jnp.dot(w_out[...], h, preferred_element_type=jnp.float32) + b_out[...]
    o_ref[...] = out.astype(jnp.bfloat16)


def _launch(xT, params, tile_b):
    """xT: (3, B_pad) bf16 with B_pad % tile_b == 0. Returns (2, B_pad) bf16."""
    B_pad = xT.shape[1]
    n_tiles = B_pad // tile_b

    # weights -> bf16 (streamed once, then VMEM-resident); biases stay f32
    kparams = [a.astype(jnp.bfloat16) if i % 2 == 0 else a.astype(jnp.float32)
               for i, a in enumerate(params)]
    n_hidden_transitions = (len(params) - 4) // 2
    kernel = functools.partial(_dqn_kernel, n_hidden_transitions)

    in_specs = [pl.BlockSpec((3, tile_b), lambda i: (0, i))]          # x: tiled on lanes
    for arr in kparams:                                               # params: whole array,
        in_specs.append(pl.BlockSpec(arr.shape, lambda i: (0, 0)))    # constant block index
    out_spec = pl.BlockSpec((2, tile_b), lambda i: (0, i))            # lane-dense output

    return pl.pallas_call(
        kernel,
        out_shape=jax.ShapeDtypeStruct((2, B_pad), jnp.bfloat16),
        grid=(n_tiles,),
        in_specs=in_specs,
        out_specs=out_spec,
        compiler_params=pltpu.CompilerParams(
            dimension_semantics=("parallel",),      # megacore / v7x dual-TC sharding
            vmem_limit_bytes=VMEM_LIMIT_BYTES),
    )(xT, *kparams)


def dqn_forward_lanes(xT, params, tile_b=None):
    """Fast path: x already batch-on-lanes as (3, B) bf16 (no wrapper transpose pass).
    Returns (2, B) bf16, lane-dense."""
    assert xT.shape[0] == 3
    B = xT.shape[1]
    if tile_b is None:
        tile_b = _choose_tile_b(B)
    B_pad = _cdiv(B, tile_b) * tile_b
    if B_pad != B:
        xT = jnp.zeros((3, B_pad), jnp.bfloat16).at[:, :B].set(xT.astype(jnp.bfloat16))
    else:
        xT = xT.astype(jnp.bfloat16)
    out_t = _launch(xT, params, tile_b)
    return out_t[:, :B]     # slice padded lanes BEFORE any consumer transpose


def dqn_forward(x, params, tile_b=None):
    """PyTorch-parity path: x any shape with numel % 3 == 0 (flattened like x.view(-1, 3)).
    params: flat list [w_in, b_in, (w_h, b_h)*, w_out, b_out] with W as (out, in), b as
    (out, 1), all f32.  Returns (B, 2) f32."""
    assert x.size % 3 == 0, "input numel must be divisible by 3"
    x2d = x.reshape(-1, 3)
    B = x2d.shape[0]
    if tile_b is None:
        tile_b = _choose_tile_b(B)
    B_pad = _cdiv(B, tile_b) * tile_b
    # single fused pad + transpose + cast pass building the bf16 lane-major operand
    xT = jnp.zeros((3, B_pad), jnp.bfloat16).at[:, :B].set(x2d.T.astype(jnp.bfloat16))
    out_t = _launch(xT, params, tile_b)
    return out_t[:, :B].T.astype(jnp.float32)


def init_dqn_params(key, hlayers):
    """Deterministic PyTorch-style init U(-1/sqrt(fan_in), 1/sqrt(fan_in)).
    Weights stored as (out_features, in_features); biases as (out_features, 1)."""
    dims = [3] + list(hlayers) + [2]
    params = []
    for fan_in, fan_out in zip(dims[:-1], dims[1:]):
        key, kw, kb = jax.random.split(key, 3)
        bound = 1.0 / (fan_in ** 0.5)
        w = jax.random.uniform(kw, (fan_out, fan_in), jnp.float32, -bound, bound)
        b = jax.random.uniform(kb, (fan_out, 1), jnp.float32, -bound, bound)
        params += [w, b]
    return params


def dqn_reference(x, params):
    """Plain-JAX reference mirroring the kernel's arithmetic (bf16 x/weights/activations,
    f32 biases and accumulation, bf16 output)."""
    x2d = x.reshape(-1, 3)
    h = x2d.astype(jnp.bfloat16).astype(jnp.float32)
    n_layers = len(params) // 2
    for i in range(n_layers):
        w = params[2 * i].astype(jnp.bfloat16).astype(jnp.float32)   # (out, in)
        b = params[2 * i + 1]                                        # (out, 1)
        h = h @ w.T + b.T
        if i < n_layers - 1:
            h = jnp.maximum(h, 0.0).astype(jnp.bfloat16).astype(jnp.float32)
    return h.astype(jnp.bfloat16).astype(jnp.float32)


if __name__ == "__main__":
    key = jax.random.PRNGKey(0)
    kx, kp, kx2 = jax.random.split(key, 3)

    Hlayers = [32, 32]          # two hidden widths -> one hidden transition
    dropout = 0.1               # identity at inference
    params = init_dqn_params(kp, Hlayers)

    # small shape, flattened to (-1, 3) like x.view(-1, 3)
    x = jax.random.normal(kx, (2, 4, 3), jnp.float32)
    out = jax.block_until_ready(dqn_forward(x, params))
    ref = dqn_reference(x, params)
    assert out.shape == (8, 2), out.shape
    assert jnp.allclose(out, ref, atol=2e-2, rtol=2e-2), "mismatch vs reference"

    # exercise the multi-tile grid path at small scale (explicit small tile)
    x2 = jax.random.normal(kx2, (1000, 3), jnp.float32)
    out2 = jax.block_until_ready(dqn_forward(x2, params, tile_b=256))
    ref2 = dqn_reference(x2, params)
    assert out2.shape == (1000, 2), out2.shape
    assert jnp.allclose(out2, ref2, atol=2e-2, rtol=2e-2), "mismatch vs reference (tiled)"

    print("KERNEL_OK")
</pallas_src>

<mosaic_0001>
module attributes {stable_mosaic.version = 11 : i64} {
  func.func @_dqn_kernel(%arg0: i32, %arg1: memref<3x128xbf16, #tpu.memory_space<vmem>>, %arg2: memref<32x3xbf16, #tpu.memory_space<vmem>>, %arg3: memref<32x1xf32, #tpu.memory_space<vmem>>, %arg4: memref<32x32xbf16, #tpu.memory_space<vmem>>, %arg5: memref<32x1xf32, #tpu.memory_space<vmem>>, %arg6: memref<2x32xbf16, #tpu.memory_space<vmem>>, %arg7: memref<2x1xf32, #tpu.memory_space<vmem>>, %arg8: memref<2x128xbf16, #tpu.memory_space<vmem>>) attributes {dimension_semantics = [#tpu.dimension_semantics<parallel>], iteration_bounds = array<i64: 1>, scalar_prefetch = 0 : i64, scratch_operands = 0 : i64, tpu.core_type = #tpu.core_type<tc>, window_params = [{transform_indices = @transform_0, window_bounds = array<i64: 3, 128>}, {pipeline_mode = #tpu.pipeline_mode<synchronous>, transform_indices = @transform_1, window_bounds = array<i64: 32, 3>}, {pipeline_mode = #tpu.pipeline_mode<synchronous>, transform_indices = @transform_2, window_bounds = array<i64: 32, 1>}, {pipeline_mode = #tpu.pipeline_mode<synchronous>, transform_indices = @transform_3, window_bounds = array<i64: 32, 32>}, {pipeline_mode = #tpu.pipeline_mode<synchronous>, transform_indices = @transform_4, window_bounds = array<i64: 32, 1>}, {pipeline_mode = #tpu.pipeline_mode<synchronous>, transform_indices = @transform_5, window_bounds = array<i64: 2, 32>}, {pipeline_mode = #tpu.pipeline_mode<synchronous>, transform_indices = @transform_6, window_bounds = array<i64: 2, 1>}, {transform_indices = @transform_7, window_bounds = array<i64: 2, 128>}]} {
    %c0 = arith.constant 0 : index
    %c0_0 = arith.constant 0 : index
    %0 = vector.load %arg2[%c0, %c0_0] : memref<32x3xbf16, #tpu.memory_space<vmem>>, vector<32x3xbf16>
    %1 = arith.extf %0 : vector<32x3xbf16> to vector<32x3xf32>
    %c0_1 = arith.constant 0 : index
    %c0_2 = arith.constant 0 : index
    %2 = vector.load %arg3[%c0_1, %c0_2] : memref<32x1xf32, #tpu.memory_space<vmem>>, vector<32x1xf32>
    %3 = vector.extract_strided_slice %1 {offsets = [0, 0], sizes = [32, 1], strides = [1, 1]} : vector<32x3xf32> to vector<32x1xf32>
    %c0_3 = arith.constant 0 : index
    %c0_4 = arith.constant 0 : index
    %4 = vector.load %arg1[%c0_3, %c0_4] : memref<3x128xbf16, #tpu.memory_space<vmem>>, vector<1x128xbf16>
    %5 = arith.extf %4 : vector<1x128xbf16> to vector<1x128xf32>
    %6 = vector.broadcast %3 : vector<32x1xf32> to vector<32x128xf32>
    %7 = vector.broadcast %5 : vector<1x128xf32> to vector<32x128xf32>
    %8 = arith.mulf %6, %7 : vector<32x128xf32>
    %9 = vector.extract_strided_slice %1 {offsets = [0, 1], sizes = [32, 1], strides = [1, 1]} : vector<32x3xf32> to vector<32x1xf32>
    %c1 = arith.constant 1 : index
    %c0_5 = arith.constant 0 : index
    %10 = vector.load %arg1[%c1, %c0_5] : memref<3x128xbf16, #tpu.memory_space<vmem>>, vector<1x128xbf16>
    %11 = arith.extf %10 : vector<1x128xbf16> to vector<1x128xf32>
    %12 = vector.broadcast %9 : vector<32x1xf32> to vector<32x128xf32>
    %13 = vector.broadcast %11 : vector<1x128xf32> to vector<32x128xf32>
    %14 = arith.mulf %12, %13 : vector<32x128xf32>
    %15 = arith.addf %8, %14 : vector<32x128xf32>
    %16 = vector.extract_strided_slice %1 {offsets = [0, 2], sizes = [32, 1], strides = [1, 1]} : vector<32x3xf32> to vector<32x1xf32>
    %c2 = arith.constant 2 : index
    %c0_6 = arith.constant 0 : index
    %17 = vector.load %arg1[%c2, %c0_6] : memref<3x128xbf16, #tpu.memory_space<vmem>>, vector<1x128xbf16>
    %18 = arith.extf %17 : vector<1x128xbf16> to vector<1x128xf32>
    %19 = vector.broadcast %16 : vector<32x1xf32> to vector<32x128xf32>
    %20 = vector.broadcast %18 : vector<1x128xf32> to vector<32x128xf32>
    %21 = arith.mulf %19, %20 : vector<32x128xf32>
    %22 = arith.addf %15, %21 : vector<32x128xf32>
    %23 = vector.broadcast %2 : vector<32x1xf32> to vector<32x128xf32>
    %24 = arith.addf %22, %23 : vector<32x128xf32>
    %cst = arith.constant 0.000000e+00 : f32
    %25 = vector.broadcast %cst : f32 to vector<32x128xf32>
    %26 = arith.maximumf %24, %25 : vector<32x128xf32>
    %27 = arith.truncf %26 : vector<32x128xf32> to vector<32x128xbf16>
    %c0_7 = arith.constant 0 : index
    %c0_8 = arith.constant 0 : index
    %28 = vector.load %arg4[%c0_7, %c0_8] : memref<32x32xbf16, #tpu.memory_space<vmem>>, vector<32x32xbf16>
    %cst_9 = arith.constant dense<0.000000e+00> : vector<32x128xf32>
    %29 = tpu.matmul %28, %27, %cst_9 {dimension_numbers = #tpu.dot_dimension_numbers<[1], [0], [0], [1], [0, 0, 1, 1], [], []>} : vector<32x32xbf16>, vector<32x128xbf16>, vector<32x128xf32> -> vector<32x128xf32>
    %c0_10 = arith.constant 0 : index
    %c0_11 = arith.constant 0 : index
    %30 = vector.load %arg5[%c0_10, %c0_11] : memref<32x1xf32, #tpu.memory_space<vmem>>, vector<32x1xf32>
    %31 = vector.broadcast %30 : vector<32x1xf32> to vector<32x128xf32>
    %32 = arith.addf %29, %31 : vector<32x128xf32>
    %cst_12 = arith.constant 0.000000e+00 : f32
    %33 = vector.broadcast %cst_12 : f32 to vector<32x128xf32>
    %34 = arith.maximumf %32, %33 : vector<32x128xf32>
    %35 = arith.truncf %34 : vector<32x128xf32> to vector<32x128xbf16>
    %c0_13 = arith.constant 0 : index
    %c0_14 = arith.constant 0 : index
    %36 = vector.load %arg6[%c0_13, %c0_14] : memref<2x32xbf16, #tpu.memory_space<vmem>>, vector<2x32xbf16>
    %cst_15 = arith.constant dense<0.000000e+00> : vector<2x128xf32>
    %37 = tpu.matmul %36, %35, %cst_15 {dimension_numbers = #tpu.dot_dimension_numbers<[1], [0], [0], [1], [0, 0, 1, 1], [], []>} : vector<2x32xbf16>, vector<32x128xbf16>, vector<2x128xf32> -> vector<2x128xf32>
    %c0_16 = arith.constant 0 : index
    %c0_17 = arith.constant 0 : index
    %38 = vector.load %arg7[%c0_16, %c0_17] : memref<2x1xf32, #tpu.memory_space<vmem>>, vector<2x1xf32>
    %39 = vector.broadcast %38 : vector<2x1xf32> to vector<2x128xf32>
    %40 = arith.addf %37, %39 : vector<2x128xf32>
    %41 = arith.truncf %40 : vector<2x128xf32> to vector<2x128xbf16>
    %c0_18 = arith.constant 0 : index
    %c0_19 = arith.constant 0 : index
    %42 = vector.load %arg8[%c0_18, %c0_19] : memref<2x128xbf16, #tpu.memory_space<vmem>>, vector<2x128xbf16>
    tpu.vector_store %arg8[%c0_18, %c0_19], %41 {strides = array<i32>} : memref<2x128xbf16, #tpu.memory_space<vmem>>, vector<2x128xbf16>,
    return
  }
  func.func @transform_0(%arg0: i32) -> (i32, i32) {
    %c0_i32 = arith.constant 0 : i32
    %c0_i32_0 = arith.constant 0 : i32
    return %c0_i32, %arg0 : i32, i32
  }
  func.func @transform_1(%arg0: i32) -> (i32, i32) {
    %c0_i32 = arith.constant 0 : i32
    %c0_i32_0 = arith.constant 0 : i32
    %c0_i32_1 = arith.constant 0 : i32
    return %c0_i32, %c0_i32_0 : i32, i32
  }
  func.func @transform_2(%arg0: i32) -> (i32, i32) {
    %c0_i32 = arith.constant 0 : i32
    %c0_i32_0 = arith.constant 0 : i32
    %c0_i32_1 = arith.constant 0 : i32
    return %c0_i32, %c0_i32_0 : i32, i32
  }
  func.func @transform_3(%arg0: i32) -> (i32, i32) {
    %c0_i32 = arith.constant 0 : i32
    %c0_i32_0 = arith.constant 0 : i32
    %c0_i32_1 = arith.constant 0 : i32
    return %c0_i32, %c0_i32_0 : i32, i32
  }
  func.func @transform_4(%arg0: i32) -> (i32, i32) {
    %c0_i32 = arith.constant 0 : i32
    %c0_i32_0 = arith.constant 0 : i32
    %c0_i32_1 = arith.constant 0 : i32
    return %c0_i32, %c0_i32_0 : i32, i32
  }
  func.func @transform_5(%arg0: i32) -> (i32, i32) {
    %c0_i32 = arith.constant 0 : i32
    %c0_i32_0 = arith.constant 0 : i32
    %c0_i32_1 = arith.constant 0 : i32
    return %c0_i32, %c0_i32_0 : i32, i32
  }
  func.func @transform_6(%arg0: i32) -> (i32, i32) {
    %c0_i32 = arith.constant 0 : i32
    %c0_i32_0 = arith.constant 0 : i32
    %c0_i32_1 = arith.constant 0 : i32
    return %c0_i32, %c0_i32_0 : i32, i32
  }
  func.func @transform_7(%arg0: i32) -> (i32, i32) {
    %c0_i32 = arith.constant 0 : i32
    %c0_i32_0 = arith.constant 0 : i32
    return %c0_i32, %arg0 : i32, i32
  }
}

</mosaic_0001>

<llo_original>
// kernel: tpu_custom_call.1
$region0: #{tpu_custom_call.1}
  #allocation0 [shape = 'u32[]', space=smem, size = 0x4, offset = 0x4, fixed_abs, tag = 'smem constant byte address 0x4 - core index']
  #allocation1 [shape = 'u32[144,128]{1,0:T(1,128)}', space=vmem, size = 0x12000, scoped, tag = 'internal scratch']
  %s0 = inlined_call_operand.vmem [shape: bf16[3,128], index: 0, kind: input, shape index: {}]
  %s1 = inlined_call_operand.vmem [shape: bf16[32,3], index: 1, kind: input, shape index: {}]
  %s2 = inlined_call_operand.vmem [shape: f32[32,1], index: 2, kind: input, shape index: {}]
  %s3 = inlined_call_operand.vmem [shape: bf16[32,32], index: 3, kind: input, shape index: {}]
  %s4 = inlined_call_operand.vmem [shape: f32[32,1], index: 4, kind: input, shape index: {}]
  %s5 = inlined_call_operand.vmem [shape: bf16[2,32], index: 5, kind: input, shape index: {}]
  %s6 = inlined_call_operand.vmem [shape: f32[2,1], index: 6, kind: input, shape index: {}]
  %s7 = inlined_call_operand.hbm [shape: bf16[2,128], index: 7, kind: output, shape index: {}]
  %s8 = sld [smem:[#allocation0]]
  $region38: #{tpu_custom_call.1} parent=0
    _
  %s10 = ssub.s32 1, %s8
  %s11 = scalar_select 0, %s10, %s8
  $region1: #{tpu_custom_call.1} parent=0
    #allocation2 [shape = 'u8[512]{0}', space=vmem, size = 0x400, scoped, tag = 'output window, operand 0, single buffered']
    #allocation3 [shape = 's32[1]{0}', space=sflag, size = 0x4, scoped, tag = 'scoped memory for tpu_custom_call.1']
    %12 = vsyncpa [#allocation3], 0
    // Predicated region
    $region2: #{tpu_custom_call.1} parent=1 // pred_check
      _
    $region3: #{tpu_custom_call.1} parent=1 // pred_check_branch
      %14 = sbr.rel (0) target = $region5
    $region4: #{tpu_custom_call.1} parent=1 // pred_region
      _
    $region5: #{tpu_custom_call.1} parent=1 // pred_fallthru
      _
    // Predicated region
    $region6: #{tpu_custom_call.1} parent=1 // pred_check
      _
    $region7: #{tpu_custom_call.1} parent=1 // pred_check_branch
      %16 = sbr.rel (0) target = $region9
    $region8: #{tpu_custom_call.1} parent=1 // pred_region
      _
    $region9: #{tpu_custom_call.1} parent=1 // pred_fallthru
      _
    // Predicated region
    $region10: #{tpu_custom_call.1} parent=1 // pred_check
      _
    $region11: #{tpu_custom_call.1} parent=1 // pred_check_branch
      %18 = sbr.rel (0) target = $region13
    $region12: #{tpu_custom_call.1} parent=1 // pred_region
      _
    $region13: #{tpu_custom_call.1} parent=1 // pred_fallthru
      _
    // Predicated region
    $region14: #{tpu_custom_call.1} parent=1 // pred_check
      _
    $region15: #{tpu_custom_call.1} parent=1 // pred_check_branch
      %20 = sbr.rel (0) target = $region17
    $region16: #{tpu_custom_call.1} parent=1 // pred_region
      _
    $region17: #{tpu_custom_call.1} parent=1 // pred_fallthru
      _
    // Predicated region
    $region18: #{tpu_custom_call.1} parent=1 // pred_check
      _
    $region19: #{tpu_custom_call.1} parent=1 // pred_check_branch
      %22 = sbr.rel (0) target = $region21
    $region20: #{tpu_custom_call.1} parent=1 // pred_region
      _
    $region21: #{tpu_custom_call.1} parent=1 // pred_fallthru
      _
    // Predicated region
    $region22: #{tpu_custom_call.1} parent=1 // pred_check
      _
    $region23: #{tpu_custom_call.1} parent=1 // pred_check_branch
      %24 = sbr.rel (0) target = $region25
    $region24: #{tpu_custom_call.1} parent=1 // pred_region
      _
    $region25: #{tpu_custom_call.1} parent=1 // pred_fallthru
      _
    // Predicated region
    $region26: #{tpu_custom_call.1} parent=1 // pred_check
      _
    $region27: #{tpu_custom_call.1} parent=1 // pred_check_branch
      %26 = sbr.rel (0) target = $region29
    $region28: #{tpu_custom_call.1} parent=1 // pred_region
      _
    $region29: #{tpu_custom_call.1} parent=1 // pred_fallthru
      _
    %v28 = vld [vmem:[%s1] sm:$0xf]
    %v29 = vld [vmem:[%s1 + $0x4] sm:$0xf]
    %v30 = vld [vmem:[%s1 + $0x8] sm:$0xf]
    %v31 = vld [vmem:[%s1 + $0xc] sm:$0xf]
    %v32 = vunpack.c.l.bf16 %v28
    %v33 = vunpack.c.l.bf16 %v29
    %v34 = vunpack.c.l.bf16 %v30
    %v35 = vunpack.c.l.bf16 %v31
    %v36 = vld [vmem:[%s2] sm:$0xff]
    %v37 = vld [vmem:[%s2 + $0x8] sm:$0xff]
    %v38 = vld [vmem:[%s2 + $0x10] sm:$0xff]
    %v39 = vld [vmem:[%s2 + $0x18] sm:$0xff]
    %v40 = vld [vmem:[%s0] sm:$0x1]
    %v41 = vunpack.c.l.bf16 %v40
    %43 = vset.pattern.permute.xlu0 0
    %44 = vperm.xlu0 %43, %v32
    %v45 = vpop.permute.xlu0 %44
    %48 = vset.pattern.permute.xlu0 0
    %49 = vperm.xlu0 %48, %v33
    %v50 = vpop.permute.xlu0 %49
    %53 = vset.pattern.permute.xlu0 0
    %54 = vperm.xlu0 %53, %v34
    %v55 = vpop.permute.xlu0 %54
    %58 = vset.pattern.permute.xlu0 0
    %59 = vperm.xlu0 %58, %v35
    %v60 = vpop.permute.xlu0 %59
    %v62 = vlaneseq
    %v63 = vshrl.u32 %v62, 7
    %v64 = vsub.s32 0, %v63
    %v65 = vrot.slane %v41, %v64
    %v66 = vmul.f32 %v45, %v65
    %v67 = vmul.f32 %v50, %v65
    %v68 = vmul.f32 %v55, %v65
    %v69 = vmul.f32 %v60, %v65
    %70 = vset.pattern.permute.xlu0 1
    %71 = vperm.xlu0 %70, %v32
    %v72 = vpop.permute.xlu0 %71
    %74 = vset.pattern.permute.xlu0 1
    %75 = vperm.xlu0 %74, %v33
    %v76 = vpop.permute.xlu0 %75
    %78 = vset.pattern.permute.xlu0 1
    %79 = vperm.xlu0 %78, %v34
    %v80 = vpop.permute.xlu0 %79
    %82 = vset.pattern.permute.xlu0 1
    %83 = vperm.xlu0 %82, %v35
    %v84 = vpop.permute.xlu0 %83
    %v86 = vlaneseq
    %v87 = vshrl.u32 %v86, 7
    %v88 = vsub.s32 1, %v87
    %v89 = vrot.slane %v41, %v88
    %v90 = vmul.f32 %v72, %v89
    %v91 = vmul.f32 %v76, %v89
    %v92 = vmul.f32 %v80, %v89
    %v93 = vmul.f32 %v84, %v89
    %v94 = vadd.f32 %v66, %v90
    %v95 = vadd.f32 %v67, %v91
    %v96 = vadd.f32 %v68, %v92
    %v97 = vadd.f32 %v69, %v93
    %v98 = vld [vmem:[%s0] sm:$0x2]
    %v99 = vunpack.c.l.bf16 %v98
    %100 = vset.pattern.permute.xlu0 2
    %101 = vperm.xlu0 %100, %v32
    %v102 = vpop.permute.xlu0 %101
    %104 = vset.pattern.permute.xlu0 2
    %105 = vperm.xlu0 %104, %v33
    %v106 = vpop.permute.xlu0 %105
    %108 = vset.pattern.permute.xlu0 2
    %109 = vperm.xlu0 %108, %v34
    %v110 = vpop.permute.xlu0 %109
    %112 = vset.pattern.permute.xlu0 2
    %113 = vperm.xlu0 %112, %v35
    %v114 = vpop.permute.xlu0 %113
    %v116 = vlaneseq
    %v117 = vshrl.u32 %v116, 7
    %v118 = vsub.s32 2, %v117
    %v119 = vrot.slane %v99, %v118
    %v120 = vmul.f32 %v102, %v119
    %v121 = vmul.f32 %v106, %v119
    %v122 = vmul.f32 %v110, %v119
    %v123 = vmul.f32 %v114, %v119
    %v124 = vadd.f32 %v94, %v120
    %v125 = vadd.f32 %v95, %v121
    %v126 = vadd.f32 %v96, %v122
    %v127 = vadd.f32 %v97, %v123
    %129 = vset.pattern.permute.xlu0 0
    %130 = vperm.xlu0 %129, %v36
    %v131 = vpop.permute.xlu0 %130
    %134 = vset.pattern.permute.xlu0 0
    %135 = vperm.xlu0 %134, %v37
    %v136 = vpop.permute.xlu0 %135
    %139 = vset.pattern.permute.xlu0 0
    %140 = vperm.xlu0 %139, %v38
    %v141 = vpop.permute.xlu0 %140
    %144 = vset.pattern.permute.xlu0 0
    %145 = vperm.xlu0 %144, %v39
    %v146 = vpop.permute.xlu0 %145
    %v148 = vadd.f32 %v124, %v131
    %v149 = vadd.f32 %v125, %v136
    %v150 = vadd.f32 %v126, %v141
    %v151 = vadd.f32 %v127, %v146
    %v152 = vmax.f32 %v148, 0.0
    %v153 = vmax.f32 %v149, 0.0
    %v154 = vmax.f32 %v150, 0.0
    %v155 = vmax.f32 %v151, 0.0
    %v156 = vpack.c.bf16 %v153, %v152
    %v157 = vpack.c.bf16 %v155, %v154
    %v158 = vld [vmem:[%s3] sm:$0xf]
    %v159 = vld [vmem:[%s3 + $0x4] sm:$0xf]
    %v160 = vld [vmem:[%s3 + $0x8] sm:$0xf]
    %v161 = vld [vmem:[%s3 + $0xc] sm:$0xf]
    %v162 = vld [vmem:[%s4] sm:$0xff]
    %v163 = vld [vmem:[%s4 + $0x8] sm:$0xff]
    %v164 = vld [vmem:[%s4 + $0x10] sm:$0xff]
    %v165 = vld [vmem:[%s4 + $0x18] sm:$0xff]
    %167 = vset.pattern.permute.xlu0 0
    %168 = vperm.xlu0 %167, %v162
    %v169 = vpop.permute.xlu0 %168
    %172 = vset.pattern.permute.xlu0 0
    %173 = vperm.xlu0 %172, %v163
    %v174 = vpop.permute.xlu0 %173
    %177 = vset.pattern.permute.xlu0 0
    %178 = vperm.xlu0 %177, %v164
    %v179 = vpop.permute.xlu0 %178
    %182 = vset.pattern.permute.xlu0 0
    %183 = vperm.xlu0 %182, %v165
    %v184 = vpop.permute.xlu0 %183
    %v190 = vunpack.c.l.b16 %v158
    %v191 = vunpack.c.l.b16 %v159
    %v192 = vunpack.c.l.b16 %v160
    %v193 = vunpack.c.l.b16 %v161
    %v194 = vpack.c.b16 %v191, %v190
    %v195 = vpack.c.b16 %v193, %v192
    %vm196 = vcmask 261120
    %v198 = vsel %vm196, %v194, 0
    %v201 = vsel %vm196, %v195, 0
    %203 = vmatprep.subr.bf16.mxu0 0
    %204 = vmatpush1.bf16.msra.mxu0 0
    %205 = vmatprep.subr.bf16.mxu0 0
    %206 = vmatpush1.bf16.msra.mxu0 0
    %207 = vmatprep.subr.bf16.mxu0 0
    %208 = vmatpush1.bf16.msra.mxu0 0
    %209 = vmatprep.subr.bf16.mxu0 0
    %210 = vmatpush1.bf16.msra.mxu0 0
    %211 = vmatprep.subr.bf16.mxu0 0
    %212 = vmatpush1.bf16.msra.mxu0 0
    %213 = vmatprep.subr.bf16.mxu0 0
    %214 = vmatpush1.bf16.msra.mxu0 0
    %215 = vmatprep.subr.bf16.mxu0 0
    %216 = vmatpush1.bf16.msra.mxu0 %v157
    %217 = vmatprep.subr.bf16.mxu0 0
    %218 = vmatpush1.bf16.msra.mxu0 %v156
    %219 = vmatprep.subr.bf16.mxu0 0
    %220 = vmatpush2.bf16.msra.mxu0 0
    %221 = vmatprep.subr.bf16.mxu0 0
    %222 = vmatpush2.bf16.msra.mxu0 0
    %223 = vmatprep.subr.bf16.mxu0 0
    %224 = vmatpush2.bf16.msra.mxu0 0
    %225 = vmatprep.subr.bf16.mxu0 0
    %226 = vmatpush2.bf16.msra.mxu0 0
    %227 = vmatprep.subr.bf16.mxu0 0
    %228 = vmatpush2.bf16.msra.mxu0 0
    %229 = vmatprep.subr.bf16.mxu0 0
    %230 = vmatpush2.bf16.msra.mxu0 0
    %231 = vmatprep.subr.bf16.mxu0 0
    %232 = vmatpush2.bf16.msra.mxu0 0
    %233 = vmatprep.subr.bf16.mxu0 0
    %234 = vmatpush2.bf16.msra.mxu0 0
    %235 = vmatprep.mubr.bf16.mxu0 0
    %236 = vmatmul.mubr.bf16.gmra.mxu0 %v198
    %v237 = vpop.f32.mrf.mxu0
    %v238 = vadd.f32 %v169, %v237
    %v239 = vpop.f32.mrf.mxu0
    %v240 = vpop.f32.mrf.mxu0
    %v241 = vadd.f32 %v174, %v240
    %v242 = vpop.f32.mrf.mxu0
    %243 = vmatprep.mubr.bf16.mxu0 0
    %244 = vmatmul.mubr.bf16.gmra.mxu0 %v201
    %v245 = vpop.f32.mrf.mxu0
    %v246 = vadd.f32 %v179, %v245
    %v247 = vpop.f32.mrf.mxu0
    %v248 = vpop.f32.mrf.mxu0
    %v249 = vadd.f32 %v184, %v248
    %v250 = vpop.f32.mrf.mxu0
    %251 = vdwg.mxu0
    %v252 = vmax.f32 %v238, 0.0
    %v253 = vmax.f32 %v241, 0.0
    %v254 = vmax.f32 %v246, 0.0
    %v255 = vmax.f32 %v249, 0.0
    %v256 = vpack.c.bf16 %v253, %v252
    %v257 = vpack.c.bf16 %v255, %v254
    %v258 = vld [vmem:[%s5] sm:$0x1]
    %v259 = vld [vmem:[%s6] sm:$0x3]
    %261 = vset.pattern.permute.xlu0 0
    %262 = vperm.xlu0 %261, %v259
    %v263 = vpop.permute.xlu0 %262
    %v266 = vsel %vm196, %v258, 0
    %268 = vmatprep.subr.bf16.mxu0 0
    %269 = vmatpush1.bf16.msra.mxu0 0
    %270 = vmatprep.subr.bf16.mxu0 0
    %271 = vmatpush1.bf16.msra.mxu0 0
    %272 = vmatprep.subr.bf16.mxu0 0
    %273 = vmatpush1.bf16.msra.mxu0 0
    %274 = vmatprep.subr.bf16.mxu0 0
    %275 = vmatpush1.bf16.msra.mxu0 0
    %276 = vmatprep.subr.bf16.mxu0 0
    %277 = vmatpush1.bf16.msra.mxu0 0
    %278 = vmatprep.subr.bf16.mxu0 0
    %279 = vmatpush1.bf16.msra.mxu0 0
    %280 = vmatprep.subr.bf16.mxu0 0
    %281 = vmatpush1.bf16.msra.mxu0 %v257
    %282 = vmatprep.subr.bf16.mxu0 0
    %283 = vmatpush1.bf16.msra.mxu0 %v256
    %284 = vmatprep.subr.bf16.mxu0 0
    %285 = vmatpush2.bf16.msra.mxu0 0
    %286 = vmatprep.subr.bf16.mxu0 0
    %287 = vmatpush2.bf16.msra.mxu0 0
    %288 = vmatprep.subr.bf16.mxu0 0
    %289 = vmatpush2.bf16.msra.mxu0 0
    %290 = vmatprep.subr.bf16.mxu0 0
    %291 = vmatpush2.bf16.msra.mxu0 0
    %292 = vmatprep.subr.bf16.mxu0 0
    %293 = vmatpush2.bf16.msra.mxu0 0
    %294 = vmatprep.subr.bf16.mxu0 0
    %295 = vmatpush2.bf16.msra.mxu0 0
    %296 = vmatprep.subr.bf16.mxu0 0
    %297 = vmatpush2.bf16.msra.mxu0 0
    %298 = vmatprep.subr.bf16.mxu0 0
    %299 = vmatpush2.bf16.msra.mxu0 0
    %300 = vmatprep.mubr.bf16.mxu0 0
    %301 = vmatmul.mubr.bf16.gmra.mxu0 %v266
    %v302 = vpop.f32.mrf.mxu0
    %v303 = vadd.f32 %v263, %v302
    %v304 = vpop.f32.mrf.mxu0
    %v305 = vpop.f32.mrf.mxu0
    %v306 = vpop.f32.mrf.mxu0
    %307 = vdwg.mxu0
    %v308 = vpack.c.bf16 %v303, %v303
    %309 = vst [vmem:[#allocation2] sm:$0x1] %v308
    // Predicated region
    $region30: #{tpu_custom_call.1} parent=1 // pred_check
      _
    $region31: #{tpu_custom_call.1} parent=1 // pred_check_branch
      %311 = sbr.rel (0) target = $region33
    $region32: #{tpu_custom_call.1} parent=1 // pred_region
      %s313 = ssub.s32 16, 16
      %314 = vsyncadd [#allocation3], %s313
      %s316 = sshll.u32 [#allocation2], 4
      %s317 = int_to_ptr.vmem [resolvable:$true] %s316
      %319 = dma.vmem_to_hbm [thread:$0]  %s317, 16, %s7, [#allocation3]
    $region33: #{tpu_custom_call.1} parent=1 // pred_fallthru
      _
    // Predicated region
    $region34: #{tpu_custom_call.1} parent=1 // pred_check
      _
    $region35: #{tpu_custom_call.1} parent=1 // pred_check_branch
      %321 = sbr.rel (0) target = $region37
    $region36: #{tpu_custom_call.1} parent=1 // pred_region
      %322 = dma.done [#allocation3], 16
    $region37: #{tpu_custom_call.1} parent=1 // pred_fallthru
      _
    %323 = vsyncpa [#allocation3], 1

</llo_original>
